<compile_context>
chip_gen: v6e
topology: v6e:2x2x1
jax: 0.10.0
libtpu: 0.0.40
codegen_flags: <defaults>
</compile_context>

<pallas_src>
import jax
import jax.numpy as jnp
import numpy as np
from jax.experimental import pallas as pl
from jax.experimental.pallas import tpu as pltpu

EPS = 1e-07
LOG_CLAMP = -100.0
_LANES = 128
_MAX_BLOCK_ROWS = 4096          # 4096 * 128 * 4B = 2 MiB per f32 block


def _round_up(x: int, m: int) -> int:
    return ((x + m - 1) // m) * m


def _penalty_kernel(x_ref, partial_ref):
    """x_ref: (TM, 128) block of flattened input; partial_ref: (8, 128) partial sums."""
    p = x_ref[...].astype(jnp.float32) + EPS
    logp = jnp.maximum(jnp.log(p), LOG_CLAMP)            # clamp_min(log(p), -100)
    t = -p * logp                                        # (TM, 128)
    tm = t.shape[0]
    # Reduce TM rows down to an (8, 128) partial with sublane-group adds
    # (layout-preserving reshape, pure VPU work; no cross-lane XLU reduce).
    partial_ref[...] = t.reshape(tm // 8, 8, _LANES).sum(axis=0)


def permutation_matrix_penalty(perm: jax.Array) -> jax.Array:
    """perm: (B, N, N). Returns scalar float32 loss matching the PyTorch module."""
    B, N, N2 = perm.shape
    assert N == N2, "expected square permutation-like matrices"
    total = B * N * N

    rows = _round_up(-(-total // _LANES), 8)             # ceil(total/128), multiple of 8
    tm = min(_MAX_BLOCK_ROWS, rows)
    padded_rows = _round_up(rows, tm)
    pad = padded_rows * _LANES - total
    grid = padded_rows // tm

    x = jnp.pad(perm.reshape(-1), (0, pad)).reshape(padded_rows, _LANES)

    partials = pl.pallas_call(
        _penalty_kernel,
        out_shape=jax.ShapeDtypeStruct((grid * 8, _LANES), jnp.float32),
        grid_spec=pltpu.PrefetchScalarGridSpec(
            num_scalar_prefetch=0,
            grid=(grid,),
            in_specs=[pl.BlockSpec((tm, _LANES), lambda i: (i, 0))],
            out_specs=pl.BlockSpec((8, _LANES), lambda i: (i, 0)),
        ),
        compiler_params=pltpu.CompilerParams(
            dimension_semantics=("parallel",),           # independent per-block partials
        ),
    )(x)

    # Exact correction for zero-padded elements:
    # each padded element contributes -(0 + eps) * max(log(eps), -100).
    eps = jnp.float32(EPS)
    t_pad = -eps * jnp.maximum(jnp.log(eps), jnp.float32(LOG_CLAMP))
    total_sum = jnp.sum(partials, dtype=jnp.float32) - jnp.float32(pad) * t_pad

    # mean over axis-1 entropies + mean over axis-2 entropies == 2 * sum(t) / (B*N)
    return 2.0 * total_sum / jnp.float32(B * N)


def _reference(perm: jax.Array) -> jax.Array:
    p = perm.astype(jnp.float32) + EPS
    t = -p * jnp.maximum(jnp.log(p), LOG_CLAMP)
    entropy_col = jnp.sum(t, axis=1)   # (B, N)
    entropy_row = jnp.sum(t, axis=2)   # (B, N)
    return jnp.mean(entropy_col) + jnp.mean(entropy_row)


if __name__ == "__main__":
    key = jax.random.PRNGKey(0)
    B, N = 2, 16
    # Soft permutation-like matrices (rows ~ softmax), strictly positive entries.
    logits = jax.random.normal(key, (B, N, N), dtype=jnp.float32)
    perm = jax.nn.softmax(logits, axis=-1)

    loss = jax.block_until_ready(permutation_matrix_penalty(perm))
    ref = jax.block_until_ready(_reference(perm))
    np.testing.assert_allclose(np.asarray(loss), np.asarray(ref), rtol=1e-5, atol=1e-5)

    print("KERNEL_OK")
</pallas_src>

<mosaic_0001>
module attributes {stable_mosaic.version = 11 : i64} {
  func.func @_penalty_kernel(%arg0: i32, %arg1: memref<8x128xf32, #tpu.memory_space<vmem>>, %arg2: memref<8x128xf32, #tpu.memory_space<vmem>>) attributes {dimension_semantics = [#tpu.dimension_semantics<parallel>], iteration_bounds = array<i64: 1>, scalar_prefetch = 0 : i64, scratch_operands = 0 : i64, tpu.core_type = #tpu.core_type<tc>, window_params = [{transform_indices = @transform_0, window_bounds = array<i64: 8, 128>}, {transform_indices = @transform_1, window_bounds = array<i64: 8, 128>}]} {
    %c0 = arith.constant 0 : index
    %c0_0 = arith.constant 0 : index
    %0 = vector.load %arg1[%c0, %c0_0] : memref<8x128xf32, #tpu.memory_space<vmem>>, vector<8x128xf32>
    %cst = arith.constant 1.000000e-07 : f32
    %1 = vector.broadcast %cst : f32 to vector<8x128xf32>
    %2 = arith.addf %0, %1 : vector<8x128xf32>
    %3 = math.log %2 : vector<8x128xf32>
    %cst_1 = arith.constant -1.000000e+02 : f32
    %4 = vector.broadcast %cst_1 : f32 to vector<8x128xf32>
    %5 = arith.maximumf %3, %4 : vector<8x128xf32>
    %cst_2 = arith.constant 0.000000e+00 : f32
    %6 = vector.broadcast %cst_2 : f32 to vector<8x128xf32>
    %7 = arith.subf %6, %2 : vector<8x128xf32>
    %8 = arith.mulf %7, %5 : vector<8x128xf32>
    %9 = vector.shape_cast %8 : vector<8x128xf32> to vector<1x8x128xf32>
    %cst_3 = arith.constant dense<0.000000e+00> : vector<8x128xf32>
    %10 = vector.multi_reduction <add>, %9, %cst_3 [0] : vector<1x8x128xf32> to vector<8x128xf32>
    %c0_4 = arith.constant 0 : index
    %c0_5 = arith.constant 0 : index
    %11 = vector.load %arg2[%c0_4, %c0_5] : memref<8x128xf32, #tpu.memory_space<vmem>>, vector<8x128xf32>
    tpu.vector_store %arg2[%c0_4, %c0_5], %10 {strides = array<i32>} : memref<8x128xf32, #tpu.memory_space<vmem>>, vector<8x128xf32>,
    return
  }
  func.func @transform_0(%arg0: i32) -> (i32, i32) {
    %c0_i32 = arith.constant 0 : i32
    %c0_i32_0 = arith.constant 0 : i32
    return %arg0, %c0_i32 : i32, i32
  }
  func.func @transform_1(%arg0: i32) -> (i32, i32) {
    %c0_i32 = arith.constant 0 : i32
    %c0_i32_0 = arith.constant 0 : i32
    return %arg0, %c0_i32 : i32, i32
  }
}

</mosaic_0001>

<llo_original>
// kernel: tpu_custom_call.1
$region0: #{tpu_custom_call.1}
  #allocation0 [shape = 'u32[]', space=smem, size = 0x4, offset = 0x4, fixed_abs, tag = 'smem constant byte address 0x4 - core index']
  #allocation1 [shape = 'u32[144,128]{1,0:T(1,128)}', space=vmem, size = 0x12000, scoped, tag = 'internal scratch']
  %s0 = inlined_call_operand.hbm [shape: f32[8,128], index: 0, kind: input, shape index: {}]
  %s1 = inlined_call_operand.hbm [shape: f32[8,128], index: 1, kind: output, shape index: {}]
  %s2 = sld [smem:[#allocation0]]
  $region18: #{tpu_custom_call.1} parent=0
    _
  %s4 = ssub.s32 1, %s2
  %s5 = scalar_select 0, %s4, %s2
  $region1: #{tpu_custom_call.1} parent=0
    #allocation2 [shape = 'u8[4096]{0}', space=vmem, size = 0x1000, scoped, tag = 'input window, operand 0, single buffered']
    #allocation3 [shape = 's32[1]{0}', space=sflag, size = 0x4, scoped, tag = 'scoped memory for tpu_custom_call.1']
    #allocation4 [shape = 's32[1]{0}', space=sflag, size = 0x4, scoped, tag = 'scoped memory for tpu_custom_call.1']
    #allocation5 [shape = 'u8[4096]{0}', space=vmem, size = 0x1000, scoped, tag = 'output window, operand 0, single buffered']
    %6 = vsyncpa [#allocation3], 0
    %7 = vsyncpa [#allocation4], 0
    // Predicated region
    $region2: #{tpu_custom_call.1} parent=1 // pred_check
      _
    $region3: #{tpu_custom_call.1} parent=1 // pred_check_branch
      %9 = sbr.rel (0) target = $region5
    $region4: #{tpu_custom_call.1} parent=1 // pred_region
      %s11 = ssub.s32 128, 128
      %12 = vsyncadd [#allocation3], %s11
      %s14 = sshll.u32 [#allocation2], 4
      %s15 = int_to_ptr.vmem [resolvable:$true] %s14
      %17 = dma.hbm_to_vmem [thread:$0]  %s0, 128, %s15, [#allocation3]
    $region5: #{tpu_custom_call.1} parent=1 // pred_fallthru
      _
    // Predicated region
    $region6: #{tpu_custom_call.1} parent=1 // pred_check
      _
    $region7: #{tpu_custom_call.1} parent=1 // pred_check_branch
      %19 = sbr.rel (0) target = $region9
    $region8: #{tpu_custom_call.1} parent=1 // pred_region
      %20 = dma.done [#allocation3], 128
    $region9: #{tpu_custom_call.1} parent=1 // pred_fallthru
      _
    %v21 = vld [vmem:[#allocation2] sm:$0xff]
    %v22 = vadd.f32 %v21, 1e-07
    %v23 = vlog2.pop %v22
    %v24 = vmul.f32 %v23, 0.6931472
    %v25 = vmax.f32 %v24, -100.0
    %v26 = vsub.f32 0.0, %v22
    %v27 = vmul.f32 %v26, %v25
    %v28 = vadd.f32 %v27, 0.0
    %29 = vst [vmem:[#allocation5] sm:$0xff] %v28
    // Predicated region
    $region10: #{tpu_custom_call.1} parent=1 // pred_check
      _
    $region11: #{tpu_custom_call.1} parent=1 // pred_check_branch
      %31 = sbr.rel (0) target = $region13
    $region12: #{tpu_custom_call.1} parent=1 // pred_region
      %s33 = ssub.s32 128, 128
      %34 = vsyncadd [#allocation4], %s33
      %s36 = sshll.u32 [#allocation5], 4
      %s37 = int_to_ptr.vmem [resolvable:$true] %s36
      %39 = dma.vmem_to_hbm [thread:$0]  %s37, 128, %s1, [#allocation4]
    $region13: #{tpu_custom_call.1} parent=1 // pred_fallthru
      _
    // Predicated region
    $region14: #{tpu_custom_call.1} parent=1 // pred_check
      _
    $region15: #{tpu_custom_call.1} parent=1 // pred_check_branch
      %41 = sbr.rel (0) target = $region17
    $region16: #{tpu_custom_call.1} parent=1 // pred_region
      %42 = dma.done [#allocation4], 128
    $region17: #{tpu_custom_call.1} parent=1 // pred_fallthru
      _
    %43 = vsyncpa [#allocation3], 1
    %44 = vsyncpa [#allocation4], 1

</llo_original>
